<compile_context>
chip_gen: v7x
topology: tpu7x:2x2x1
jax: 0.10.0
libtpu: 0.0.40
codegen_flags: <defaults>
</compile_context>

<pallas_src>
import functools
import math

import numpy as np
import jax
import jax.numpy as jnp
from jax.experimental import pallas as pl
from jax.experimental.pallas import tpu as pltpu


def _pick_block_rows(n_rows, bytes_per_row, block_rows=None, target_bytes=4 << 20):
    """Largest divisor of n_rows whose per-step block stays under target_bytes."""
    if block_rows is not None:
        assert n_rows % block_rows == 0, "block_rows must divide bs * num_anchors"
        return block_rows
    best = 1
    for d in range(1, n_rows + 1):
        if n_rows % d == 0 and d * bytes_per_row <= target_bytes:
            best = d
    return best


# -----------------------------------------------------------------------------
# Inference branch: box decoding kernel
# -----------------------------------------------------------------------------
def decode_kernel(pred_ref, scale_ref, out_ref, *, in_w):
    # pred_ref / out_ref block: (Nb, ATTRS, HW);  scale_ref block: (Nb, ATTRS, 1)
    p = pred_ref[...]                                         # (Nb, ATTRS, HW)
    row = jax.lax.broadcasted_iota(jnp.int32, p.shape, 1)     # attr index
    col = jax.lax.broadcasted_iota(jnp.int32, p.shape, 2)     # flat cell index
    col_f = col.astype(jnp.float32)
    inv_w = 1.0 / in_w
    gy = jnp.floor((col_f + 0.5) * inv_w)                     # cell row (j)
    gx = col_f - gy * in_w                                    # cell col (i)

    # per-attribute grid offset: attr 0 -> gx, attr 1 -> gy, else 0
    offset = jnp.where(row == 0, gx, jnp.where(row == 1, gy, 0.0))
    is_wh = jnp.logical_and(row >= 2, row < 4)

    # attrs 2/3: exp(p);  everything else: sigmoid(p) (+ grid offset for 0/1).
    # Values computed on the non-selected branch are discarded by the select;
    # the kernel is memory-bound so the redundant EUP work is hidden.
    val = jnp.where(is_wh, jnp.exp(p), jax.nn.sigmoid(p) + offset)
    # per-row scale: [stride_w, stride_h, anchor_w, anchor_h, 1, 1, ...]
    out_ref[...] = val * scale_ref[...]                       # single full-tile store


def yolo_decode(inp, anchors, num_classes, img_size, block_rows=None):
    """Equivalent of YOLOLoss.forward(input, targets=None)."""
    bs, C, H, W = inp.shape
    A = len(anchors)
    attrs = 5 + num_classes
    assert C == A * attrs
    HW = H * W
    N = bs * A
    stride_h = img_size[1] / H
    stride_w = img_size[0] / W

    # Contiguous reshape NCHW -> (B*A, ATTRS, H*W); kept f32 (inputs arrive f32).
    pred_k = inp.reshape(N, attrs, HW).astype(jnp.float32)

    # Tiny per-(batch,anchor) per-attribute scale vector.  Replaces full-HW
    # gx/gy/anchor broadcast HBM inputs (grid offsets are built in-kernel).
    scale_np = np.ones((N, attrs, 1), np.float32)
    scale_np[:, 0, 0] = stride_w
    scale_np[:, 1, 0] = stride_h
    for a in range(A):
        # exp(w) * (anchor_w/stride_w) * stride_w == exp(w) * anchor_w (pixels)
        scale_np[a::A, 2, 0] = anchors[a][0]
        scale_np[a::A, 3, 0] = anchors[a][1]
    scale = jnp.asarray(scale_np)

    nb = _pick_block_rows(N, attrs * HW * 4 * 2, block_rows)
    kernel = functools.partial(decode_kernel, in_w=float(W))

    out = pl.pallas_call(
        kernel,
        out_shape=jax.ShapeDtypeStruct((N, attrs, HW), jnp.float32),
        grid=(N // nb,),
        in_specs=[
            pl.BlockSpec((nb, attrs, HW), lambda i: (i, 0, 0)),
            pl.BlockSpec((nb, attrs, 1), lambda i: (i, 0, 0)),
        ],
        out_specs=pl.BlockSpec((nb, attrs, HW), lambda i: (i, 0, 0)),
        compiler_params=pltpu.CompilerParams(
            dimension_semantics=("parallel",),
            vmem_limit_bytes=32 * 1024 * 1024),
    )(pred_k, scale)

    # Glue: reorder to PyTorch output layout (bs, A*H*W, 5+NC).  Kept outside the
    # kernel: attrs (=5+NC) as the lane dim would force masked partial stores.
    out = out.reshape(bs, A, attrs, HW).transpose(0, 1, 3, 2)
    return out.reshape(bs, A * HW, attrs)


# -----------------------------------------------------------------------------
# Training branch: tiled loss kernel with SMEM running-sum accumulators
# -----------------------------------------------------------------------------
def loss_kernel(pred_ref, tgt_ref, o_ref, acc_ref, *, n_cells, n_cls):
    step = pl.program_id(0)

    @pl.when(step == 0)
    def _init():
        for i in range(7):
            acc_ref[i] = 0.0

    # packed targets slab rows: [mask, noobj_mask, tx, ty, tw, th, tcls_0..]
    m = tgt_ref[:, 0, :]
    nm = tgt_ref[:, 1, :]
    tx = tgt_ref[:, 2, :]
    ty = tgt_ref[:, 3, :]
    tw = tgt_ref[:, 4, :]
    th = tgt_ref[:, 5, :]
    tcls = tgt_ref[:, 6:, :]             # (Nb, NC, HW)

    # prediction rows as static Ref views of the contiguous (Nb, ATTRS, HW) tile
    px = pred_ref[:, 0, :]
    py = pred_ref[:, 1, :]
    pw = pred_ref[:, 2, :]
    ph = pred_ref[:, 3, :]
    pconf = pred_ref[:, 4, :]
    pcls = pred_ref[:, 5:, :]            # (Nb, NC, HW)

    def bce_logits(x, t):
        # elementwise BCE-with-logits == BCELoss(sigmoid(x), t); masked-off
        # elements are multiplied by a 0/1 mask outside, matching PyTorch.
        return jnp.maximum(x, 0.0) - t * x + jnp.log(1.0 + jnp.exp(-jnp.abs(x)))

    acc_ref[0] += jnp.sum(m * bce_logits(px, tx))
    acc_ref[1] += jnp.sum(m * bce_logits(py, ty))
    acc_ref[2] += jnp.sum(m * (pw - tw) ** 2)
    acc_ref[3] += jnp.sum(m * (ph - th) ** 2)
    # conf terms: BCE(sigmoid(x)*m, m) = m*softplus(-x);
    #             BCE(sigmoid(x)*nm, 0) = nm*softplus(x)   (shared transcendental)
    sp = jnp.log(1.0 + jnp.exp(-jnp.abs(pconf)))
    relu_c = jnp.maximum(pconf, 0.0)
    acc_ref[4] += jnp.sum(m * (relu_c - pconf + sp))
    acc_ref[5] += jnp.sum(nm * (relu_c + sp))
    # class term: per-cell mask broadcast across the class axis in-kernel
    acc_ref[6] += jnp.sum(m[:, None, :] * bce_logits(pcls, tcls))

    @pl.when(step == pl.num_programs(0) - 1)
    def _finalize():
        inv_n = 1.0 / n_cells
        lx = acc_ref[0] * inv_n
        ly = acc_ref[1] * inv_n
        lw = acc_ref[2] * inv_n
        lh = acc_ref[3] * inv_n
        lconf = (acc_ref[4] + 0.5 * acc_ref[5]) * inv_n
        lcls = acc_ref[6] * (1.0 / (n_cells * n_cls))
        o_ref[0] = 2.5 * (lx + ly) + 2.5 * (lw + lh) + lconf + lcls
        o_ref[1] = lx
        o_ref[2] = ly
        o_ref[3] = lw
        o_ref[4] = lh
        o_ref[5] = lconf
        o_ref[6] = lcls


def bbox_iou_np(box1, box2):
    b1_x1, b1_y1, b1_x2, b1_y2 = box1[:, 0], box1[:, 1], box1[:, 2], box1[:, 3]
    b2_x1, b2_y1, b2_x2, b2_y2 = box2[:, 0], box2[:, 1], box2[:, 2], box2[:, 3]
    ix1 = np.maximum(b1_x1, b2_x1)
    iy1 = np.maximum(b1_y1, b2_y1)
    ix2 = np.minimum(b1_x2, b2_x2)
    iy2 = np.minimum(b1_y2, b2_y2)
    inter = np.clip(ix2 - ix1 + 1, 0, None) * np.clip(iy2 - iy1 + 1, 0, None)
    a1 = (b1_x2 - b1_x1 + 1) * (b1_y2 - b1_y1 + 1)
    a2 = (b2_x2 - b2_x1 + 1) * (b2_y2 - b2_y1 + 1)
    return inter / (a1 + a2 - inter + 1e-16)


# TODO(synk): get_target is a data-dependent Python scalar loop over GT boxes
# (argmax over anchor IoUs, integer cell indexing) — kept host-side in NumPy.
def get_target_np(target, anchors, num_anchors, num_classes, in_w, in_h,
                  ignore_threshold):
    bs = target.shape[0]
    mask = np.zeros((bs, num_anchors, in_h, in_w), np.float32)
    noobj_mask = np.ones((bs, num_anchors, in_h, in_w), np.float32)
    tx = np.zeros_like(mask)
    ty = np.zeros_like(mask)
    tw = np.zeros_like(mask)
    th = np.zeros_like(mask)
    tconf = np.zeros_like(mask)
    tcls = np.zeros((bs, num_anchors, in_h, in_w, num_classes), np.float32)
    anchors_np = np.array(anchors, np.float32)
    for b in range(bs):
        for t in range(target.shape[1]):
            if target[b, t].sum() == 0:
                continue
            gx = float(target[b, t, 1]) * in_w
            gy = float(target[b, t, 2]) * in_h
            gw = float(target[b, t, 3]) * in_w
            gh = float(target[b, t, 4]) * in_h
            gi = int(gx)
            gj = int(gy)
            gt_box = np.array([[0, 0, gw, gh]], np.float32)
            anchor_shapes = np.concatenate(
                (np.zeros((num_anchors, 2), np.float32), anchors_np), 1)
            anch_ious = bbox_iou_np(gt_box, anchor_shapes)
            noobj_mask[b, anch_ious > ignore_threshold, gj, gi] = 0
            best_n = int(np.argmax(anch_ious))
            mask[b, best_n, gj, gi] = 1
            tx[b, best_n, gj, gi] = gx - gi
            ty[b, best_n, gj, gi] = gy - gj
            tw[b, best_n, gj, gi] = math.log(gw / anchors[best_n][0] + 1e-16)
            th[b, best_n, gj, gi] = math.log(gh / anchors[best_n][1] + 1e-16)
            tconf[b, best_n, gj, gi] = 1
            tcls[b, best_n, gj, gi, int(target[b, t, 0])] = 1
    return mask, noobj_mask, tx, ty, tw, th, tconf, tcls


def yolo_loss_train(inp, targets_np, anchors, num_classes, img_size,
                    block_rows=None):
    """Equivalent of YOLOLoss.forward(input, targets).  Returns
    [total, loss_x, loss_y, loss_w, loss_h, loss_conf, loss_cls]."""
    bs, C, H, W = inp.shape
    A = len(anchors)
    attrs = 5 + num_classes
    assert C == A * attrs
    HW = H * W
    N = bs * A
    stride_h = img_size[1] / H
    stride_w = img_size[0] / W
    scaled = [(aw / stride_w, ah / stride_h) for aw, ah in anchors]

    mask, noobj, tx, ty, tw, th, _tconf, tcls = get_target_np(
        targets_np, scaled, A, num_classes, W, H, 0.5)

    # One contiguous prediction slab (N, ATTRS, HW) plus ONE packed target slab
    # (N, 6+NC, HW): only two input streams for the pipeline, HW on the lane axis.
    pred = inp.reshape(N, attrs, HW).astype(jnp.float32)
    tgt_np = np.concatenate(
        [np.stack([mask, noobj, tx, ty, tw, th], axis=2).reshape(N, 6, HW),
         np.transpose(tcls, (0, 1, 4, 2, 3)).reshape(N, num_classes, HW)],
        axis=1).astype(np.float32)
    tgt = jnp.asarray(tgt_np)

    bytes_per_row = (attrs + 6 + num_classes) * HW * 4
    nb = _pick_block_rows(N, bytes_per_row, block_rows)
    grid = (N // nb,)

    kernel = functools.partial(loss_kernel, n_cells=float(N * HW),
                               n_cls=float(num_classes))
    out = pl.pallas_call(
        kernel,
        out_shape=jax.ShapeDtypeStruct((7,), jnp.float32),
        grid=grid,
        in_specs=[
            pl.BlockSpec((nb, attrs, HW), lambda i: (i, 0, 0)),
            pl.BlockSpec((nb, 6 + num_classes, HW), lambda i: (i, 0, 0)),
        ],
        out_specs=pl.BlockSpec(memory_space=pltpu.MemorySpace.SMEM),
        scratch_shapes=[pltpu.SMEM((8,), jnp.float32)],
        compiler_params=pltpu.CompilerParams(
            dimension_semantics=("arbitrary",),     # sequential accumulation
            vmem_limit_bytes=32 * 1024 * 1024),
    )(pred, tgt)
    return out


# -----------------------------------------------------------------------------
# Pure-JAX references (PyTorch semantics) for verification
# -----------------------------------------------------------------------------
def decode_ref(inp, anchors, num_classes, img_size):
    bs, _, H, W = inp.shape
    A = len(anchors)
    attrs = 5 + num_classes
    stride_h = img_size[1] / H
    stride_w = img_size[0] / W
    sa_w = jnp.array([aw / stride_w for aw, _ in anchors], jnp.float32)
    sa_h = jnp.array([ah / stride_h for _, ah in anchors], jnp.float32)
    pred = inp.reshape(bs, A, attrs, H, W).transpose(0, 1, 3, 4, 2)
    x = jax.nn.sigmoid(pred[..., 0])
    y = jax.nn.sigmoid(pred[..., 1])
    w = pred[..., 2]
    h = pred[..., 3]
    conf = jax.nn.sigmoid(pred[..., 4])
    pcls = jax.nn.sigmoid(pred[..., 5:])
    gx = jnp.broadcast_to(jnp.arange(W, dtype=jnp.float32)[None, :], (H, W))
    gy = jnp.broadcast_to(jnp.arange(H, dtype=jnp.float32)[:, None], (H, W))
    bx = (x + gx) * stride_w
    by = (y + gy) * stride_h
    bw = jnp.exp(w) * sa_w[None, :, None, None] * stride_w
    bh = jnp.exp(h) * sa_h[None, :, None, None] * stride_h
    boxes = jnp.stack([bx, by, bw, bh], axis=-1).reshape(bs, -1, 4)
    return jnp.concatenate(
        [boxes, conf.reshape(bs, -1, 1), pcls.reshape(bs, -1, num_classes)], -1)


def loss_ref(inp, targets_np, anchors, num_classes, img_size):
    bs, _, H, W = inp.shape
    A = len(anchors)
    attrs = 5 + num_classes
    stride_h = img_size[1] / H
    stride_w = img_size[0] / W
    scaled = [(aw / stride_w, ah / stride_h) for aw, ah in anchors]
    p5 = inp.reshape(bs, A, attrs, H, W).astype(jnp.float32)
    xs = jax.nn.sigmoid(p5[:, :, 0])
    ys = jax.nn.sigmoid(p5[:, :, 1])
    ws, hs = p5[:, :, 2], p5[:, :, 3]
    conf = jax.nn.sigmoid(p5[:, :, 4])
    cls = jax.nn.sigmoid(p5[:, :, 5:].transpose(0, 1, 3, 4, 2))
    tgt = get_target_np(targets_np, scaled, A, num_classes, W, H, 0.5)
    mask, noobj, tx, ty, tw, th, _tconf, tcls = [jnp.asarray(a) for a in tgt]

    def bce(p, t):
        lp = jnp.maximum(jnp.log(p), -100.0)
        l1 = jnp.maximum(jnp.log(1.0 - p), -100.0)
        return -jnp.mean(t * lp + (1.0 - t) * l1)

    def mse(p, t):
        return jnp.mean((p - t) ** 2)

    lx = bce(xs * mask, tx * mask)
    ly = bce(ys * mask, ty * mask)
    lw = mse(ws * mask, tw * mask)
    lh = mse(hs * mask, th * mask)
    lconf = bce(conf * mask, mask) + 0.5 * bce(conf * noobj, noobj * 0.0)
    mc = mask[..., None]
    lcls = bce(cls * mc, tcls * mc)
    total = 2.5 * (lx + ly) + 2.5 * (lw + lh) + lconf + lcls
    return jnp.stack([total, lx, ly, lw, lh, lconf, lcls])


# -----------------------------------------------------------------------------
if __name__ == "__main__":
    bs, A, num_classes = 2, 3, 4
    H = W = 16
    attrs = 5 + num_classes
    img_size = (128, 128)                       # stride = 8
    anchors = [(10.0, 13.0), (16.0, 30.0), (33.0, 23.0)]

    key = jax.random.PRNGKey(0)
    k1, k2, k3 = jax.random.split(key, 3)
    x = jax.random.normal(k1, (bs, A * attrs, H, W), jnp.float32)

    # targets: (bs, T, 5) rows of [class, cx, cy, w, h], all normalized to [0,1]
    T = 3
    cls_t = jax.random.randint(k2, (bs, T, 1), 0, num_classes).astype(jnp.float32)
    box_t = jax.random.uniform(k3, (bs, T, 4), minval=0.1, maxval=0.8)
    targets = np.array(jnp.concatenate([cls_t, box_t], axis=-1), np.float32)
    targets[1, 2, :] = 0.0                      # exercise the empty-target skip

    # --- inference branch (targets=None); block_rows=2 -> 3 grid steps ---
    dec = jax.block_until_ready(
        yolo_decode(x, anchors, num_classes, img_size, block_rows=2))
    dec_r = decode_ref(x, anchors, num_classes, img_size)
    np.testing.assert_allclose(np.asarray(dec), np.asarray(dec_r),
                               rtol=1e-3, atol=1e-3)

    # --- training branch (targets given); block_rows=2 exercises accumulation ---
    losses = jax.block_until_ready(
        yolo_loss_train(x, targets, anchors, num_classes, img_size, block_rows=2))
    losses_r = loss_ref(x, targets, anchors, num_classes, img_size)
    np.testing.assert_allclose(np.asarray(losses), np.asarray(losses_r),
                               rtol=3e-4, atol=1e-5)

    print("KERNEL_OK")
</pallas_src>

<mosaic_0001>
module attributes {stable_mosaic.version = 11 : i64} {
  func.func @decode_kernel(%arg0: i32, %arg1: memref<2x9x256xf32, #tpu.memory_space<vmem>>, %arg2: memref<2x9x1xf32, #tpu.memory_space<vmem>>, %arg3: memref<2x9x256xf32, #tpu.memory_space<vmem>>) attributes {dimension_semantics = [#tpu.dimension_semantics<parallel>], iteration_bounds = array<i64: 3>, scalar_prefetch = 0 : i64, scratch_operands = 0 : i64, tpu.core_type = #tpu.core_type<tc>, window_params = [{transform_indices = @transform_0, window_bounds = array<i64: 2, 9, 256>}, {transform_indices = @transform_1, window_bounds = array<i64: 2, 9, 1>}, {transform_indices = @transform_2, window_bounds = array<i64: 2, 9, 256>}]} {
    %c0 = arith.constant 0 : index
    %c0_0 = arith.constant 0 : index
    %c0_1 = arith.constant 0 : index
    %0 = vector.load %arg1[%c0, %c0_0, %c0_1] : memref<2x9x256xf32, #tpu.memory_space<vmem>>, vector<2x9x256xf32>
    %1 = tpu.iota {dimensions = array<i32: 1>} : vector<2x9x256xi32>
    %2 = tpu.iota {dimensions = array<i32: 2>} : vector<2x9x256xi32>
    %3 = arith.sitofp %2 : vector<2x9x256xi32> to vector<2x9x256xf32>
    %cst = arith.constant 5.000000e-01 : f32
    %4 = vector.broadcast %cst : f32 to vector<2x9x256xf32>
    %5 = arith.addf %3, %4 : vector<2x9x256xf32>
    %cst_2 = arith.constant 6.250000e-02 : f32
    %6 = vector.broadcast %cst_2 : f32 to vector<2x9x256xf32>
    %7 = arith.mulf %5, %6 : vector<2x9x256xf32>
    %8 = math.floor %7 : vector<2x9x256xf32>
    %cst_3 = arith.constant 1.600000e+01 : f32
    %9 = vector.broadcast %cst_3 : f32 to vector<2x9x256xf32>
    %10 = arith.mulf %8, %9 : vector<2x9x256xf32>
    %11 = arith.subf %3, %10 : vector<2x9x256xf32>
    %c0_i32 = arith.constant 0 : i32
    %12 = vector.broadcast %c0_i32 : i32 to vector<2x9x256xi32>
    %13 = arith.cmpi eq, %1, %12 : vector<2x9x256xi32>
    %c1_i32 = arith.constant 1 : i32
    %14 = vector.broadcast %c1_i32 : i32 to vector<2x9x256xi32>
    %15 = arith.cmpi eq, %1, %14 : vector<2x9x256xi32>
    %cst_4 = arith.constant 0.000000e+00 : f32
    %16 = vector.broadcast %cst_4 : f32 to vector<2x9x256xf32>
    %17 = arith.select %15, %8, %16 : vector<2x9x256xi1>, vector<2x9x256xf32>
    %18 = arith.select %13, %11, %17 : vector<2x9x256xi1>, vector<2x9x256xf32>
    %c2_i32 = arith.constant 2 : i32
    %19 = vector.broadcast %c2_i32 : i32 to vector<2x9x256xi32>
    %20 = arith.cmpi sge, %1, %19 : vector<2x9x256xi32>
    %c4_i32 = arith.constant 4 : i32
    %21 = vector.broadcast %c4_i32 : i32 to vector<2x9x256xi32>
    %22 = arith.cmpi slt, %1, %21 : vector<2x9x256xi32>
    %23 = arith.andi %20, %22 : vector<2x9x256xi1>
    %24 = math.exp %0 : vector<2x9x256xf32>
    %25 = arith.negf %0 : vector<2x9x256xf32>
    %26 = math.exp %25 : vector<2x9x256xf32>
    %cst_5 = arith.constant 1.000000e+00 : f32
    %27 = vector.broadcast %cst_5 : f32 to vector<2x9x256xf32>
    %28 = arith.addf %27, %26 : vector<2x9x256xf32>
    %29 = arith.divf %27, %28 : vector<2x9x256xf32>
    %30 = arith.addf %29, %18 : vector<2x9x256xf32>
    %31 = arith.select %23, %24, %30 : vector<2x9x256xi1>, vector<2x9x256xf32>
    %c0_6 = arith.constant 0 : index
    %c0_7 = arith.constant 0 : index
    %c0_8 = arith.constant 0 : index
    %32 = vector.load %arg2[%c0_6, %c0_7, %c0_8] : memref<2x9x1xf32, #tpu.memory_space<vmem>>, vector<2x9x1xf32>
    %33 = vector.broadcast %32 : vector<2x9x1xf32> to vector<2x9x256xf32>
    %34 = arith.mulf %31, %33 : vector<2x9x256xf32>
    %c0_9 = arith.constant 0 : index
    %c0_10 = arith.constant 0 : index
    %c0_11 = arith.constant 0 : index
    %35 = vector.load %arg3[%c0_9, %c0_10, %c0_11] : memref<2x9x256xf32, #tpu.memory_space<vmem>>, vector<2x9x256xf32>
    tpu.vector_store %arg3[%c0_9, %c0_10, %c0_11], %34 {strides = array<i32>} : memref<2x9x256xf32, #tpu.memory_space<vmem>>, vector<2x9x256xf32>,
    return
  }
  func.func @transform_0(%arg0: i32) -> (i32, i32, i32) {
    %c0_i32 = arith.constant 0 : i32
    %c0_i32_0 = arith.constant 0 : i32
    %c0_i32_1 = arith.constant 0 : i32
    return %arg0, %c0_i32, %c0_i32_0 : i32, i32, i32
  }
  func.func @transform_1(%arg0: i32) -> (i32, i32, i32) {
    %c0_i32 = arith.constant 0 : i32
    %c0_i32_0 = arith.constant 0 : i32
    %c0_i32_1 = arith.constant 0 : i32
    return %arg0, %c0_i32, %c0_i32_0 : i32, i32, i32
  }
  func.func @transform_2(%arg0: i32) -> (i32, i32, i32) {
    %c0_i32 = arith.constant 0 : i32
    %c0_i32_0 = arith.constant 0 : i32
    %c0_i32_1 = arith.constant 0 : i32
    return %arg0, %c0_i32, %c0_i32_0 : i32, i32, i32
  }
}

</mosaic_0001>

<llo_original>
// kernel: tpu_custom_call.1
$region0: #{tpu_custom_call.1}
  #allocation0 [shape = 'u32[]', space=smem, size = 0x4, offset = 0x4, fixed_abs, tag = 'smem constant byte address 0x4 - core index']
  #allocation1 [shape = 'u32[144,128]{1,0:T(1,128)}', space=vmem, size = 0x12000, scoped, tag = 'internal scratch']
  %s0 = inlined_call_operand.vmem [shape: f32[6,9,256], index: 0, kind: input, shape index: {}]
  %s1 = inlined_call_operand.vmem [shape: f32[6,9,1], index: 1, kind: input, shape index: {}]
  %s2 = inlined_call_operand.vmem [shape: f32[6,9,256], index: 2, kind: output, shape index: {}]
  %s3 = sld [smem:[#allocation0]]
  $region41: #{tpu_custom_call.1} parent=0
    _
  %s5 = ssub.s32 1, %s3
  %s6 = scalar_select 0, %s5, %s3
  loop: start=0, step=1, limit=5
  $region2: #{tpu_custom_call.1} parent=0 // loop_pre_header
    _
  $region3: #{tpu_custom_call.1} parent=0 // loop_header
    %s8 = sphi 0, %s12
    %p9 = scmp.ge.s32.totalorder %s8, 5
    %s18 = sphi 0, %s20
    %s21 = sphi 0, %s18
    %s22 = sphi 0, %s21
    %s38 = sphi 0, %s22
    %s44 = sphi 0, %s46
    %s47 = sphi 0, %s44
    %s48 = sphi 0, %s47
    %s64 = sphi 0, %s48
    %s70 = sphi 0, %s72
    %s73 = sphi 0, %s70
    %s74 = sphi 0, %s73
    %s90 = sphi 0, %s74
  $region4: #{tpu_custom_call.1} parent=0 // loop_header_branch
    %11 = sbr.rel (%p9) target = $region8
  $region5: #{tpu_custom_call.1} parent=0 // loop_body
    %s13 = ssub.s32 %s8, 1
    %s14 = ssub.s32 %s8, 2
    %s15 = sadd.s32 %s8, 1
    %s16 = ssub.s32 %s8, %s15
    %p17 = scmp.eq.s32.totalorder %s16, 0
    %s19 = sadd.s32 %s18, 1
    %s20 = scalar_select %p17, %s18, %s19
    %p23 = pneg %p17
    %p24 = scmp.eq.s32.totalorder %s8, 2
    %p25 = por %p23, %p24
    %p26 = scmp.ne.s32.totalorder %s18, %s21
    %p27 = scmp.eq.s32.totalorder %s8, 0
    %p28 = por %p26, %p27
    %p29 = scmp.ne.s32.totalorder %s18, %s21
    %p30 = scmp.eq.s32.totalorder %s13, 2
    %p31 = por %p29, %p30
    %p32 = scmp.ne.s32.totalorder %s21, %s22
    %p33 = scmp.eq.s32.totalorder %s13, 0
    %p34 = por %p32, %p33
    %p35 = scmp.ne.s32.totalorder %s21, %s22
    %p36 = scmp.eq.s32.totalorder %s14, 2
    %p37 = por %p35, %p36
    %p39 = scmp.ne.s32.totalorder %s22, %s38
    %p40 = scmp.eq.s32.totalorder %s14, 0
    %p41 = por %p39, %p40
    %s42 = ssub.s32 %s8, %s15
    %p43 = scmp.eq.s32.totalorder %s42, 0
    %s45 = sadd.s32 %s44, 1
    %s46 = scalar_select %p43, %s44, %s45
    %p49 = pneg %p43
    %p50 = scmp.eq.s32.totalorder %s8, 2
    %p51 = por %p49, %p50
    %p52 = scmp.ne.s32.totalorder %s44, %s47
    %p53 = scmp.eq.s32.totalorder %s8, 0
    %p54 = por %p52, %p53
    %p55 = scmp.ne.s32.totalorder %s44, %s47
    %p56 = scmp.eq.s32.totalorder %s13, 2
    %p57 = por %p55, %p56
    %p58 = scmp.ne.s32.totalorder %s47, %s48
    %p59 = scmp.eq.s32.totalorder %s13, 0
    %p60 = por %p58, %p59
    %p61 = scmp.ne.s32.totalorder %s47, %s48
    %p62 = scmp.eq.s32.totalorder %s14, 2
    %p63 = por %p61, %p62
    %p65 = scmp.ne.s32.totalorder %s48, %s64
    %p66 = scmp.eq.s32.totalorder %s14, 0
    %p67 = por %p65, %p66
    %s68 = ssub.s32 %s8, %s15
    %p69 = scmp.eq.s32.totalorder %s68, 0
    %s71 = sadd.s32 %s70, 1
    %s72 = scalar_select %p69, %s70, %s71
    %p75 = pneg %p69
    %p76 = scmp.eq.s32.totalorder %s8, 2
    %p77 = por %p75, %p76
    %p78 = scmp.ne.s32.totalorder %s70, %s73
    %p79 = scmp.eq.s32.totalorder %s8, 0
    %p80 = por %p78, %p79
    %p81 = scmp.ne.s32.totalorder %s70, %s73
    %p82 = scmp.eq.s32.totalorder %s13, 2
    %p83 = por %p81, %p82
    %p84 = scmp.ne.s32.totalorder %s73, %s74
    %p85 = scmp.eq.s32.totalorder %s13, 0
    %p86 = por %p84, %p85
    %p87 = scmp.ne.s32.totalorder %s73, %s74
    %p88 = scmp.eq.s32.totalorder %s14, 2
    %p89 = por %p87, %p88
    %p91 = scmp.ne.s32.totalorder %s74, %s90
    %p92 = scmp.eq.s32.totalorder %s14, 0
    %p93 = por %p91, %p92
    %p94 = scmp.le.s32.totalorder 1, %s8
    %p95 = scmp.lt.s32.totalorder %s8, 4
    %p96 = pnand %p94, %p95
    %p97 = pneg %p96
    // Predicated region
    $region9: #{tpu_custom_call.1} parent=5 // pred_check
      _
    $region10: #{tpu_custom_call.1} parent=5 // pred_check_branch
      %99 = sbr.rel (%p96) target = $region12
    $region11: #{tpu_custom_call.1} parent=5 // pred_region
      %s100 = ssub.s32 %s8, 1
    $region12: #{tpu_custom_call.1} parent=5 // pred_fallthru
      _
    %p101 = scmp.lt.s32.totalorder %s8, 3
    // Predicated region
    $region13: #{tpu_custom_call.1} parent=5 // pred_check
      %p102 = pneg %p101
    $region14: #{tpu_custom_call.1} parent=5 // pred_check_branch
      %104 = sbr.rel (%p102) target = $region16
    $region15: #{tpu_custom_call.1} parent=5 // pred_region
      // Predicated region
      $region17: #{tpu_custom_call.1} parent=15 // pred_check
        %p105 = pneg %p28
      $region18: #{tpu_custom_call.1} parent=15 // pred_check_branch
        %107 = sbr.rel (%p105) target = $region20
      $region19: #{tpu_custom_call.1} parent=15 // pred_region
        %s108 = smul.u32 2, %s8
        %p109 = scmp.lt.s32.totalorder %s108, 5
        %s110 = scalar_select %p109, %s108, 5
        %s111 = smul.addr %s110, 4
        %s112 = smul.addr %s111, 8
        %s113 = scalar_lea.vmem %s0, %s112
        %s114 = smul.u32 2, %s8
      $region20: #{tpu_custom_call.1} parent=15 // pred_fallthru
        _
      // Predicated region
      $region21: #{tpu_custom_call.1} parent=15 // pred_check
        %p115 = pneg %p54
      $region22: #{tpu_custom_call.1} parent=15 // pred_check_branch
        %117 = sbr.rel (%p115) target = $region24
      $region23: #{tpu_custom_call.1} parent=15 // pred_region
        %s118 = smul.u32 2, %s8
        %p119 = scmp.lt.s32.totalorder %s118, 5
        %s120 = scalar_select %p119, %s118, 5
        %s121 = smul.addr %s120, 2
        %s122 = smul.addr %s121, 8
        %s123 = scalar_lea.vmem %s1, %s122
        %s124 = smul.u32 2, %s8
      $region24: #{tpu_custom_call.1} parent=15 // pred_fallthru
        _
    $region16: #{tpu_custom_call.1} parent=5 // pred_fallthru
      _
    %p125 = scmp.le.s32.totalorder 1, %s8
    %p126 = scmp.lt.s32.totalorder %s8, 4
    %p127 = pnand %p125, %p126
    %p128 = pneg %p127
    // Predicated region
    $region25: #{tpu_custom_call.1} parent=5 // pred_check
      _
    $region26: #{tpu_custom_call.1} parent=5 // pred_check_branch
      %130 = sbr.rel (%p127) target = $region28
    $region27: #{tpu_custom_call.1} parent=5 // pred_region
      %s131 = ssub.s32 %s8, 1
      %s132 = smul.u32 2, %s13
      %p133 = scmp.lt.s32.totalorder %s132, 5
      %s134 = scalar_select %p133, %s132, 5
      %s135 = smul.addr %s134, 4
      %s136 = smul.addr %s135, 8
      %s137 = scalar_lea.vmem %s0, %s136
      %p138 = pneg %p34
      %p139 = pneg %p31
      %s140 = smul.u32 2, %s13
      %p141 = scmp.lt.s32.totalorder %s140, 5
      %s142 = scalar_select %p141, %s140, 5
      %s143 = smul.addr %s142, 2
      %s144 = smul.addr %s143, 8
      %s145 = scalar_lea.vmem %s1, %s144
      %p146 = pneg %p60
      %p147 = pneg %p57
      %p148 = pneg %p86
      %p149 = pneg %p83
      %s150 = smul.u32 2, %s13
      %p151 = scmp.lt.s32.totalorder %s150, 5
      %s152 = scalar_select %p151, %s150, 5
      %s153 = smul.addr %s152, 4
      %s154 = smul.addr %s153, 8
      %s155 = scalar_lea.vmem %s2, %s154
      %s156 = smul.u32 2, %s13
      %p157 = scmp.lt.s32.totalorder %s156, 5
      %s158 = scalar_select %p157, %s156, 5
      %s159 = smul.addr %s158, 4
      %s160 = smul.addr %s159, 8
      %s161 = scalar_lea.vmem %s0, %s160
      %s162 = smul.u32 2, %s13
      %s163 = smul.u32 2, %s13
      %p164 = scmp.lt.s32.totalorder %s163, 5
      %s165 = scalar_select %p164, %s163, 5
      %s166 = smul.addr %s165, 2
      %s167 = smul.addr %s166, 8
      %s168 = scalar_lea.vmem %s1, %s167
      %s169 = smul.u32 2, %s13
      %s170 = smul.u32 2, %s13
      %p171 = scmp.lt.s32.totalorder %s170, 5
      %s172 = scalar_select %p171, %s170, 5
      %s173 = smul.addr %s172, 4
      %s174 = smul.addr %s173, 8
      %s175 = scalar_lea.vmem %s2, %s174
      %s176 = smul.u32 2, %s13
      %v177 = vld [vmem:[%s161] sm:$0xff]
      %v178 = vld [vmem:[%s161 + $0x8] sm:$0xff]
      %v179 = vld [vmem:[%s161 + $0x10] sm:$0x1]
      %v180 = vld [vmem:[%s161 + $0x18] sm:$0x1]
      %v181 = vld [vmem:[%s161 + $0x20] sm:$0xff]
      %v182 = vld [vmem:[%s161 + $0x28] sm:$0xff]
      %v183 = vld [vmem:[%s161 + $0x30] sm:$0x1]
      %v184 = vld [vmem:[%s161 + $0x38] sm:$0x1]
      %v185 = vlaneseq
      %v186 = vshrl.u32 %v185, 7
      %v187 = vadd.s32 %v186, 8
      %v188 = vlaneseq
      %v189 = vand.u32 %v188, 127
      %v190 = vadd.s32 %v189, 128
      %v191 = vcvt.s32.f32 %v189
      %v192 = vcvt.s32.f32 %v190
      %v193 = vadd.f32 %v191, 0.5
      %v194 = vadd.f32 %v192, 0.5
      %v195 = vmul.f32 %v193, 0.0625
      %v196 = vmul.f32 %v194, 0.0625
      %v197 = vfloor.f32 %v195
      %v198 = vfloor.f32 %v196
      %v199 = vmul.f32 %v197, 16.0
      %v200 = vmul.f32 %v198, 16.0
      %v201 = vsub.f32 %v191, %v199
      %v202 = vsub.f32 %v192, %v200
      %vm203 = vcmp.eq.s32.totalorder %v186, 0
      %vm204 = vcmp.eq.s32.totalorder %v187, 0
      %vm205 = vcmp.eq.s32.totalorder %v186, 1
      %vm206 = vcmp.eq.s32.totalorder %v187, 1
      %v207 = vsel %vm205, %v197, 0.0
      %v208 = vsel %vm205, %v198, 0.0
      %v209 = vsel %vm206, %v197, 0.0
      %v210 = vsel %vm206, %v198, 0.0
      %v211 = vsel %vm203, %v201, %v207
      %v212 = vsel %vm203, %v202, %v208
      %v213 = vsel %vm204, %v201, %v209
      %v214 = vsel %vm204, %v202, %v210
      %vm215 = vcmp.ge.s32.totalorder %v186, 2
      %vm216 = vcmp.ge.s32.totalorder %v187, 2
      %vm217 = vcmp.lt.s32.totalorder %v186, 4
      %vm218 = vcmp.lt.s32.totalorder %v187, 4
      %vm219 = vmand %vm215, %vm217
      %vm220 = vmand %vm216, %vm218
      %v221 = vmul.f32 %v177, 1.442695
      %v222 = vpow.pop %v221
      %v223 = vmul.f32 %v178, 1.442695
      %v224 = vpow.pop %v223
      %v225 = vmul.f32 %v179, 1.442695
      %v226 = vpow.pop %v225
      %v227 = vmul.f32 %v180, 1.442695
      %v228 = vpow.pop %v227
      %v229 = vmul.f32 %v181, 1.442695
      %v230 = vpow.pop %v229
      %v231 = vmul.f32 %v182, 1.442695
      %v232 = vpow.pop %v231
      %v233 = vmul.f32 %v183, 1.442695
      %v234 = vpow.pop %v233
      %v235 = vmul.f32 %v184, 1.442695
      %v236 = vpow.pop %v235
      %v237 = vxor.u32 %v177, 2147483648
      %v238 = vxor.u32 %v178, 2147483648
      %v239 = vxor.u32 %v179, 2147483648
      %v240 = vxor.u32 %v180, 2147483648
      %v241 = vxor.u32 %v181, 2147483648
      %v242 = vxor.u32 %v182, 2147483648
      %v243 = vxor.u32 %v183, 2147483648
      %v244 = vxor.u32 %v184, 2147483648
      %v245 = vmul.f32 %v237, 1.442695
      %v246 = vpow.pop %v245
      %v247 = vmul.f32 %v238, 1.442695
      %v248 = vpow.pop %v247
      %v249 = vmul.f32 %v239, 1.442695
      %v250 = vpow.pop %v249
      %v251 = vmul.f32 %v240, 1.442695
      %v252 = vpow.pop %v251
      %v253 = vmul.f32 %v241, 1.442695
      %v254 = vpow.pop %v253
      %v255 = vmul.f32 %v242, 1.442695
      %v256 = vpow.pop %v255
      %v257 = vmul.f32 %v243, 1.442695
      %v258 = vpow.pop %v257
      %v259 = vmul.f32 %v244, 1.442695
      %v260 = vpow.pop %v259
      %v261 = vadd.f32 %v246, 1.0
      %v262 = vadd.f32 %v248, 1.0
      %v263 = vadd.f32 %v250, 1.0
      %v264 = vadd.f32 %v252, 1.0
      %v265 = vadd.f32 %v254, 1.0
      %v266 = vadd.f32 %v256, 1.0
      %v267 = vadd.f32 %v258, 1.0
      %v268 = vadd.f32 %v260, 1.0
      %v269 = vrcp.pop %v261
      %v270 = vmul.f32 1.0, %v269
      %v271 = vrcp.pop %v262
      %v272 = vmul.f32 1.0, %v271
      %v273 = vrcp.pop %v263
      %v274 = vmul.f32 1.0, %v273
      %v275 = vrcp.pop %v264
      %v276 = vmul.f32 1.0, %v275
      %v277 = vrcp.pop %v265
      %v278 = vmul.f32 1.0, %v277
      %v279 = vrcp.pop %v266
      %v280 = vmul.f32 1.0, %v279
      %v281 = vrcp.pop %v267
      %v282 = vmul.f32 1.0, %v281
      %v283 = vrcp.pop %v268
      %v284 = vmul.f32 1.0, %v283
      %v285 = vadd.f32 %v270, %v211
      %v286 = vadd.f32 %v272, %v212
      %v287 = vadd.f32 %v274, %v213
      %v288 = vadd.f32 %v276, %v214
      %v289 = vadd.f32 %v278, %v211
      %v290 = vadd.f32 %v280, %v212
      %v291 = vadd.f32 %v282, %v213
      %v292 = vadd.f32 %v284, %v214
      %v293 = vsel %vm219, %v222, %v285
      %v294 = vsel %vm219, %v224, %v286
      %v295 = vsel %vm220, %v226, %v287
      %v296 = vsel %vm220, %v228, %v288
      %v297 = vsel %vm219, %v230, %v289
      %v298 = vsel %vm219, %v232, %v290
      %v299 = vsel %vm220, %v234, %v291
      %v300 = vsel %vm220, %v236, %v292
      %v301 = vld [vmem:[%s168] sm:$0xff]
      %v302 = vld [vmem:[%s168 + $0x8] sm:$0x1]
      %v303 = vld [vmem:[%s168 + $0x10] sm:$0xff]
      %v304 = vld [vmem:[%s168 + $0x18] sm:$0x1]
      %306 = vset.pattern.permute.xlu0 0
      %307 = vperm.xlu0 %306, %v301
      %v308 = vpop.permute.xlu0 %307
      %311 = vset.pattern.permute.xlu0 0
      %312 = vperm.xlu0 %311, %v302
      %v313 = vpop.permute.xlu0 %312
      %316 = vset.pattern.permute.xlu0 0
      %317 = vperm.xlu0 %316, %v303
      %v318 = vpop.permute.xlu0 %317
      %321 = vset.pattern.permute.xlu0 0
      %322 = vperm.xlu0 %321, %v304
      %v323 = vpop.permute.xlu0 %322
      %v325 = vmul.f32 %v293, %v308
      %v326 = vmul.f32 %v294, %v308
      %v327 = vmul.f32 %v295, %v313
      %v328 = vmul.f32 %v296, %v313
      %v329 = vmul.f32 %v297, %v318
      %v330 = vmul.f32 %v298, %v318
      %v331 = vmul.f32 %v299, %v323
      %v332 = vmul.f32 %v300, %v323
      %333 = vst [vmem:[%s175] sm:$0xff] %v325
      %334 = vst [vmem:[%s175 + $0x8] sm:$0xff] %v326
      %335 = vst [vmem:[%s175 + $0x10] sm:$0x1] %v327
      %336 = vst [vmem:[%s175 + $0x18] sm:$0x1] %v328
      %337 = vst [vmem:[%s175 + $0x20] sm:$0xff] %v329
      %338 = vst [vmem:[%s175 + $0x28] sm:$0xff] %v330
      %339 = vst [vmem:[%s175 + $0x30] sm:$0x1] %v331
      %340 = vst [vmem:[%s175 + $0x38] sm:$0x1] %v332
      %s341 = smul.u32 2, %s13
      %p342 = scmp.lt.s32.totalorder %s341, 5
      %s343 = scalar_select %p342, %s341, 5
      %s344 = smul.addr %s343, 4
      %s345 = smul.addr %s344, 8
      %s346 = scalar_lea.vmem %s2, %s345
      // Predicated region
      $region29: #{tpu_custom_call.1} parent=27 // pred_check
        %p347 = pneg %p83
      $region30: #{tpu_custom_call.1} parent=27 // pred_check_branch
        %349 = sbr.rel (%p347) target = $region32
      $region31: #{tpu_custom_call.1} parent=27 // pred_region
        %s350 = smul.u32 2, %s13
      $region32: #{tpu_custom_call.1} parent=27 // pred_fallthru
        _
    $region28: #{tpu_custom_call.1} parent=5 // pred_fallthru
      _
    %p351 = scmp.le.s32.totalorder 2, %s8
    // Predicated region
    $region33: #{tpu_custom_call.1} parent=5 // pred_check
      %p352 = pneg %p351
    $region34: #{tpu_custom_call.1} parent=5 // pred_check_branch
      %354 = sbr.rel (%p352) target = $region36
    $region35: #{tpu_custom_call.1} parent=5 // pred_region
      %s355 = ssub.s32 %s8, 2
      // Predicated region
      $region37: #{tpu_custom_call.1} parent=35 // pred_check
        %p356 = pneg %p89
      $region38: #{tpu_custom_call.1} parent=35 // pred_check_branch
        %358 = sbr.rel (%p356) target = $region40
      $region39: #{tpu_custom_call.1} parent=35 // pred_region
        %s359 = smul.u32 2, %s14
        %p360 = scmp.lt.s32.totalorder %s359, 5
        %s361 = scalar_select %p360, %s359, 5
        %s362 = smul.addr %s361, 4
        %s363 = smul.addr %s362, 8
        %s364 = scalar_lea.vmem %s2, %s363
      $region40: #{tpu_custom_call.1} parent=35 // pred_fallthru
        _
    $region36: #{tpu_custom_call.1} parent=5 // pred_fallthru
      _
  $region6: #{tpu_custom_call.1} parent=0 // loop_footer
    %s12 = sadd.s32 1, %s8
  $region7: #{tpu_custom_call.1} parent=0 // loop_footer_branch
    %7 = sbr.rel target = $region3
  $region8: #{tpu_custom_call.1} parent=0 // loop_exit
    _

</llo_original>
